<compile_context>
chip_gen: v5e
topology: v5e:2x2
jax: 0.10.0
libtpu: 0.0.40
codegen_flags: <defaults>
</compile_context>

<pallas_src>
import math

import jax
import jax.numpy as jnp
from jax import lax
from jax.experimental import pallas as pl
from jax.experimental.pallas import tpu as pltpu


def build_pe_table(embed_dim: int, max_len: int, dtype=jnp.float32) -> jnp.ndarray:
    """Deterministic sinusoidal positional-encoding buffer, shape (1, max_len, E)."""
    position = jnp.arange(max_len, dtype=jnp.float32)[:, None]            # (max_len, 1)
    div_term = jnp.exp(
        jnp.arange(0, embed_dim, 2, dtype=jnp.float32)
        * (-math.log(10000.0) / embed_dim)
    )                                                                      # (ceil(E/2),)
    pe = jnp.zeros((max_len, embed_dim), dtype=jnp.float32)
    pe = pe.at[:, 0::2].set(jnp.sin(position * div_term))
    pe = pe.at[:, 1::2].set(jnp.cos(position * div_term))
    return pe[None, :, :].astype(dtype)                                    # (1, max_len, E)


# splitmix32-style mixing constants (written so they fit two's-complement int32).
_GOLDEN = -1640531527    # 0x9E3779B9
_MIX1 = 0x7FEB352D       # 2146287917
_MIX2 = -2072974709      # 0x846CA68B


def _make_pe_kernel(p: float, use_dropout: bool, tb: int, lanes: int):
    """Kernel: out = dropout(x + pe) on one (tb, lanes) lane-dense tile."""
    inv_keep = 1.0 / (1.0 - p) if use_dropout else 1.0

    def kernel(seed_ref, x_ref, pe_ref, o_ref):
        # x block (tb, lanes); pe block (1, lanes) broadcasts across the rows (VPU add).
        y = x_ref[...].astype(jnp.float32) + pe_ref[...].astype(jnp.float32)
        if use_dropout:
            # Stateless counter-based PRNG: hash(seed, global element index).
            row = lax.broadcasted_iota(jnp.int32, (tb, lanes), 0)
            col = lax.broadcasted_iota(jnp.int32, (tb, lanes), 1)
            gidx = (row + pl.program_id(0) * tb) * lanes + col   # unique per element
            h = gidx ^ (seed_ref[0] * jnp.int32(_GOLDEN))
            h = h ^ lax.shift_right_logical(h, 16)
            h = h * jnp.int32(_MIX1)
            h = h ^ lax.shift_right_logical(h, 15)
            h = h * jnp.int32(_MIX2)
            h = h ^ lax.shift_right_logical(h, 16)
            # Low 24 bits -> uniform in [0, 1); keep with probability 1 - p.
            u = (h & jnp.int32(0x00FFFFFF)).astype(jnp.float32) * jnp.float32(
                1.0 / (1 << 24)
            )
            y = jnp.where(u >= jnp.float32(p), y * jnp.float32(inv_keep), 0.0)
        o_ref[...] = y.astype(o_ref.dtype)

    return kernel


def positional_encoding_forward(
    x, pe_table, *, p=0.1, training=False, seed=0, force_kernel=False
):
    """x: (B, S, E).  pe_table: (1, max_len, E).  Returns (B, S, E)."""
    B, S, E = x.shape
    # dtype-matched pe slice (halves pe HBM traffic for bf16 models).
    pe_slice = pe_table[:, :S, :].astype(x.dtype)

    if training and p >= 1.0:            # guard 1/(1-p); nn.Dropout(p=1.0) -> all zeros
        return jnp.zeros_like(x)
    use_dropout = bool(training) and float(p) > 0.0
    if not use_dropout and not force_kernel:
        # Eval mode: plain fused broadcast add; no kernel launch overhead.
        return x + pe_slice

    # Lane-dense layout: flatten (S, E) -> S*E (free layout plumbing on contiguous x).
    L = S * E
    x2 = x.reshape(B, L)
    pe2 = pe_slice.reshape(1, L)

    # Batch tile: as many rows as fit ~2 MiB per x tile.  The second-minor block dim
    # must be a multiple of 8 or equal the full batch (the (8,128) constraint); the
    # lane dim L always equals the full array dim, so any L is legal.
    itemsize = jnp.dtype(x.dtype).itemsize
    row_bytes = max(1, L * itemsize)
    tb = max(1, min(B, (2 * 1024 * 1024) // row_bytes))
    if tb < B:
        tb = max(8, (tb // 8) * 8) if B >= 8 else B
    grid_b = pl.cdiv(B, tb)

    # VMEM budget: double-buffered x and out tiles + the resident pe row, with slack.
    # Raise the scoped limit only when the default (16 MiB on v5e) would be too tight.
    tile_bytes = tb * row_bytes
    need_bytes = 4 * tile_bytes + 2 * row_bytes
    vmem_limit = None
    if need_bytes > 12 * 1024 * 1024:
        vmem_limit = min(100 * 1024 * 1024, int(need_bytes * 1.5))

    seed_arr = jnp.asarray([seed], dtype=jnp.int32)
    kernel = _make_pe_kernel(float(p), use_dropout, tb, L)

    out2 = pl.pallas_call(
        kernel,
        out_shape=jax.ShapeDtypeStruct((B, L), x.dtype),
        grid_spec=pltpu.PrefetchScalarGridSpec(
            num_scalar_prefetch=1,                                  # seed lands in SMEM
            grid=(grid_b,),
            in_specs=[
                pl.BlockSpec((tb, L), lambda b, seed: (b, 0)),      # x: tb batch rows
                pl.BlockSpec((1, L), lambda b, seed: (0, 0)),       # pe: resident across grid
            ],
            out_specs=pl.BlockSpec((tb, L), lambda b, seed: (b, 0)),
        ),
        compiler_params=pltpu.CompilerParams(
            dimension_semantics=("parallel",),                      # hash RNG is order-free
            vmem_limit_bytes=vmem_limit,
        ),
    )(seed_arr, x2, pe2)
    return out2.reshape(B, S, E)


if __name__ == "__main__":
    # Small shapes consistent with the module: batch=2, seq=8, embed_dim=32.
    B, S, E = 2, 8, 32
    MAX_LEN = 64
    DROPOUT_P = 0.1

    key = jax.random.PRNGKey(0)
    x = jax.random.normal(key, (B, S, E), dtype=jnp.float32)

    pe_table = build_pe_table(E, MAX_LEN)
    ref = x + pe_table[:, :S, :]

    # 1) Eval mode (dropout = identity): bypass path must match the reference.
    out_eval = jax.block_until_ready(
        positional_encoding_forward(x, pe_table, p=DROPOUT_P, training=False)
    )
    assert out_eval.shape == (B, S, E)
    assert jnp.allclose(out_eval, ref, atol=1e-6, rtol=1e-6), "eval-mode mismatch"

    # 2) Kernel add path (force the pallas_call with dropout disabled): exact check.
    out_kernel = jax.block_until_ready(
        positional_encoding_forward(
            x, pe_table, p=DROPOUT_P, training=False, force_kernel=True
        )
    )
    assert jnp.allclose(out_kernel, ref, atol=1e-6, rtol=1e-6), "kernel add mismatch"

    # 3) Training mode: inverted dropout via the stateless in-kernel hash RNG.
    out_train = jax.block_until_ready(
        positional_encoding_forward(x, pe_table, p=DROPOUT_P, training=True, seed=123)
    )
    kept = out_train != 0.0
    assert jnp.allclose(
        jnp.where(kept, out_train, 0.0),
        jnp.where(kept, ref / (1.0 - DROPOUT_P), 0.0),
        atol=1e-5,
        rtol=1e-5,
    ), "training-mode dropout scaling mismatch"
    dropped = int(jnp.sum(~kept))
    assert 0 < dropped < int(0.5 * B * S * E), "implausible dropout rate"

    # Determinism: same seed -> identical mask.
    out_train2 = jax.block_until_ready(
        positional_encoding_forward(x, pe_table, p=DROPOUT_P, training=True, seed=123)
    )
    assert jnp.array_equal(out_train, out_train2), "dropout mask not deterministic"

    print("KERNEL_OK")
</pallas_src>

<mosaic_0001>
module attributes {stable_mosaic.version = 11 : i64} {
  func.func @kernel(%arg0: i32, %arg1: memref<1xi32, #tpu.memory_space<smem>>, %arg2: memref<2x256xf32, #tpu.memory_space<vmem>>, %arg3: memref<1x256xf32, #tpu.memory_space<vmem>>, %arg4: memref<2x256xf32, #tpu.memory_space<vmem>>) attributes {dimension_semantics = [#tpu.dimension_semantics<parallel>], iteration_bounds = array<i64: 1>, scalar_prefetch = 1 : i64, scratch_operands = 0 : i64, tpu.core_type = #tpu.core_type<tc>, window_params = [{transform_indices = @transform_0, window_bounds = array<i64: 2, 256>}, {pipeline_mode = #tpu.pipeline_mode<synchronous>, transform_indices = @transform_1, window_bounds = array<i64: 1, 256>}, {transform_indices = @transform_2, window_bounds = array<i64: 2, 256>}]} {
    %c0 = arith.constant 0 : index
    %c0_0 = arith.constant 0 : index
    %0 = vector.load %arg2[%c0, %c0_0] : memref<2x256xf32, #tpu.memory_space<vmem>>, vector<2x256xf32>
    %c0_1 = arith.constant 0 : index
    %c0_2 = arith.constant 0 : index
    %1 = vector.load %arg3[%c0_1, %c0_2] : memref<1x256xf32, #tpu.memory_space<vmem>>, vector<1x256xf32>
    %2 = vector.broadcast %1 : vector<1x256xf32> to vector<2x256xf32>
    %3 = arith.addf %0, %2 : vector<2x256xf32>
    %c0_3 = arith.constant 0 : index
    %c0_4 = arith.constant 0 : index
    %4 = vector.load %arg4[%c0_3, %c0_4] : memref<2x256xf32, #tpu.memory_space<vmem>>, vector<2x256xf32>
    tpu.vector_store %arg4[%c0_3, %c0_4], %3 {strides = array<i32>} : memref<2x256xf32, #tpu.memory_space<vmem>>, vector<2x256xf32>,
    return
  }
  func.func @transform_0(%arg0: i32, %arg1: memref<1xi32, #tpu.memory_space<smem>>) -> (i32, i32) {
    %c0_i32 = arith.constant 0 : i32
    %c0_i32_0 = arith.constant 0 : i32
    return %arg0, %c0_i32 : i32, i32
  }
  func.func @transform_1(%arg0: i32, %arg1: memref<1xi32, #tpu.memory_space<smem>>) -> (i32, i32) {
    %c0_i32 = arith.constant 0 : i32
    %c0_i32_0 = arith.constant 0 : i32
    %c0_i32_1 = arith.constant 0 : i32
    return %c0_i32, %c0_i32_0 : i32, i32
  }
  func.func @transform_2(%arg0: i32, %arg1: memref<1xi32, #tpu.memory_space<smem>>) -> (i32, i32) {
    %c0_i32 = arith.constant 0 : i32
    %c0_i32_0 = arith.constant 0 : i32
    return %arg0, %c0_i32 : i32, i32
  }
}

</mosaic_0001>

<llo_original>
// kernel: tpu_custom_call.1
$region0: #{tpu_custom_call.1}
  #allocation0 [shape = 'u32[]', space=smem, size = 0x4, offset = 0x4, fixed_abs, tag = 'smem constant byte address 0x4 - core index']
  #allocation1 [shape = 'u32[72,128]{1,0:T(1,128)}', space=vmem, size = 0x9000, scoped, tag = 'internal scratch']
  #allocation2 [shape = 's32[1]{0}', space=sflag, size = 0x4, scoped, tag = 'scoped memory for tpu_custom_call.1']
  #allocation3 [shape = 's32[1]{0:T(128)S(6)}', space=smem, size = 0x200, scoped, tag = 'prefetched SMEM operand 0']
  %s0 = inlined_call_operand.<no memory space> [shape: s32[1], index: 0, kind: input, shape index: {}]
  %s1 = inlined_call_operand.hbm [shape: f32[2,256], index: 1, kind: input, shape index: {}]
  %s2 = inlined_call_operand.vmem [shape: f32[1,256], index: 2, kind: input, shape index: {}]
  %s3 = inlined_call_operand.hbm [shape: f32[2,256], index: 3, kind: output, shape index: {}]
  %s4 = sld [smem:[#allocation0]]
  $region22: #{tpu_custom_call.1} parent=0
    _
  %s6 = ssub.s32 1, %s4
  %s7 = scalar_select 0, %s6, %s4
  %8 = sst [smem:[#allocation3]] %s0
  $region1: #{tpu_custom_call.1} parent=0
    #allocation4 [shape = 'u8[2048]{0}', space=vmem, size = 0x800, scoped, tag = 'input window, operand 1, single buffered']
    #allocation5 [shape = 's32[1]{0}', space=sflag, size = 0x4, scoped, tag = 'scoped memory for tpu_custom_call.1']
    #allocation6 [shape = 's32[1]{0}', space=sflag, size = 0x4, scoped, tag = 'scoped memory for tpu_custom_call.1']
    #allocation7 [shape = 'u8[2048]{0}', space=vmem, size = 0x800, scoped, tag = 'output window, operand 0, single buffered']
    %9 = vsyncpa [#allocation5], 0
    %10 = vsyncpa [#allocation6], 0
    // Predicated region
    $region2: #{tpu_custom_call.1} parent=1 // pred_check
      _
    $region3: #{tpu_custom_call.1} parent=1 // pred_check_branch
      %12 = sbr.rel (0) target = $region5
    $region4: #{tpu_custom_call.1} parent=1 // pred_region
      %14 = vsyncadd [#allocation5], 0
      %s16 = sshll.u32 %s1, 4
      %s17 = int_to_ptr.hbm [resolvable:$true] %s16
      %s18 = sshll.u32 [#allocation4], 4
      %s19 = int_to_ptr.vmem [resolvable:$true] %s18
      %21 = dma.hbm_to_vmem [thread:$0]  %s17, 64, %s19, [#allocation5]
    $region5: #{tpu_custom_call.1} parent=1 // pred_fallthru
      _
    // Predicated region
    $region6: #{tpu_custom_call.1} parent=1 // pred_check
      _
    $region7: #{tpu_custom_call.1} parent=1 // pred_check_branch
      %23 = sbr.rel (0) target = $region9
    $region8: #{tpu_custom_call.1} parent=1 // pred_region
      _
    $region9: #{tpu_custom_call.1} parent=1 // pred_fallthru
      _
    // Predicated region
    $region10: #{tpu_custom_call.1} parent=1 // pred_check
      _
    $region11: #{tpu_custom_call.1} parent=1 // pred_check_branch
      %25 = sbr.rel (0) target = $region13
    $region12: #{tpu_custom_call.1} parent=1 // pred_region
      %27 = dma.done [#allocation5], 64
    $region13: #{tpu_custom_call.1} parent=1 // pred_fallthru
      _
    %v28 = vld [vmem:[#allocation4] sm:$0xf]
    %v29 = vld [vmem:[%s2] sm:$0x3]
    %v31 = vperm.slane %v29, 0
    %v32 = vperm.slane %v29, 1
    %v33 = vrot.slane %v32, 6
    %vm34 = vcmask 1041408
    %v35 = vsel %vm34, %v31, %v33
    %v37 = vadd.f32 %v28, %v35
    %38 = vst [vmem:[#allocation7] sm:$0xf] %v37
    // Predicated region
    $region14: #{tpu_custom_call.1} parent=1 // pred_check
      _
    $region15: #{tpu_custom_call.1} parent=1 // pred_check_branch
      %40 = sbr.rel (0) target = $region17
    $region16: #{tpu_custom_call.1} parent=1 // pred_region
      %42 = vsyncadd [#allocation6], 0
      %s44 = sshll.u32 [#allocation7], 4
      %s45 = int_to_ptr.vmem [resolvable:$true] %s44
      %s46 = sshll.u32 %s3, 4
      %s47 = int_to_ptr.hbm [resolvable:$true] %s46
      %49 = dma.vmem_to_hbm [thread:$0]  %s45, 64, %s47, [#allocation6]
    $region17: #{tpu_custom_call.1} parent=1 // pred_fallthru
      _
    // Predicated region
    $region18: #{tpu_custom_call.1} parent=1 // pred_check
      _
    $region19: #{tpu_custom_call.1} parent=1 // pred_check_branch
      %51 = sbr.rel (0) target = $region21
    $region20: #{tpu_custom_call.1} parent=1 // pred_region
      %53 = dma.done [#allocation6], 64
    $region21: #{tpu_custom_call.1} parent=1 // pred_fallthru
      _
    %54 = vsyncpa [#allocation5], 1
    %55 = vsyncpa [#allocation6], 1

</llo_original>
